<compile_context>
chip_gen: v6e
topology: v6e:2x2x1
jax: 0.10.0
libtpu: 0.0.40
codegen_flags: <defaults>
</compile_context>

<pallas_src>
import jax
import jax.numpy as jnp
from jax.experimental import pallas as pl
from jax.experimental.pallas import tpu as pltpu


def lstm_cell_kernel(x_ref, h_ref, c_ref, wx_ref, wh_ref, b_ref,
                     h_out_ref, c_out_ref):
    H = h_out_ref.shape[1]

    # Two MXU matmuls into a single f32 accumulator (no concat copy).
    gates = jnp.dot(x_ref[...], wx_ref[...], preferred_element_type=jnp.float32)
    gates = gates + jnp.dot(h_ref[...], wh_ref[...],
                            preferred_element_type=jnp.float32)
    gates = gates + b_ref[...]  # (1, 4H) f32 bias broadcast

    # sigmoid(z) = 1 / (1 + exp(-z)): exp on EUP, approx reciprocal on EUP,
    # keeping the VALU free of divides.
    def sigmoid(z):
        return pl.reciprocal(1.0 + jnp.exp(-z), approx=True)

    # Lane-aligned (H = multiple of 128) gate slices; torch.split order.
    i_t = sigmoid(gates[:, 0 * H:1 * H])
    f_t = sigmoid(gates[:, 1 * H:2 * H])
    o_t = sigmoid(gates[:, 2 * H:3 * H])
    c_hat = jnp.tanh(gates[:, 3 * H:4 * H])

    c_prev = c_ref[...].astype(jnp.float32)
    c_t = f_t * c_prev + i_t * c_hat
    h_t = o_t * jnp.tanh(c_t)

    h_out_ref[...] = h_t.astype(h_out_ref.dtype)
    c_out_ref[...] = c_t.astype(c_out_ref.dtype)


def lstm_cell(x, h, c, w, b):
    """Pallas LSTM cell.

    x: (B, I) f32, h/c: (B, H) f32, w: (I+H, 4H) f32 (pre-transposed nn.Linear
    weight), b: (1, 4H) f32.  Returns (h_t, c_t) in f32.
    """
    B, H = h.shape
    I = x.shape[1]
    assert H % 128 == 0, "H must be a multiple of 128 for lane-aligned gate slices"

    # Pre-split the fused weight and cast matmul operands to bf16; the cell
    # state and bias stay f32 (elementwise path only).
    wx = w[:I, :].astype(jnp.bfloat16)
    wh = w[I:, :].astype(jnp.bfloat16)
    x_bf = x.astype(jnp.bfloat16)
    h_bf = h.astype(jnp.bfloat16)

    out_shape = (
        jax.ShapeDtypeStruct((B, H), jnp.float32),
        jax.ShapeDtypeStruct((B, H), jnp.float32),
    )

    def full(a):
        return pl.BlockSpec(a.shape, lambda: (0,) * a.ndim)

    flops = 2 * B * (I + H) * (4 * H)
    transcendentals = 6 * B * H  # 3 exp + 2 tanh + 1 reciprocal per (B, H) elem
    bytes_accessed = (
        x_bf.size * 2 + h_bf.size * 2 + c.size * 4
        + wx.size * 2 + wh.size * 2 + b.size * 4
        + 2 * B * H * 4
    )

    return pl.pallas_call(
        lstm_cell_kernel,
        out_shape=out_shape,
        in_specs=[full(x_bf), full(h_bf), full(c), full(wx), full(wh), full(b)],
        out_specs=(
            pl.BlockSpec((B, H), lambda: (0, 0)),
            pl.BlockSpec((B, H), lambda: (0, 0)),
        ),
        cost_estimate=pl.CostEstimate(
            flops=flops,
            transcendentals=transcendentals,
            bytes_accessed=bytes_accessed,
        ),
        compiler_params=pltpu.CompilerParams(
            vmem_limit_bytes=32 * 1024 * 1024,
        ),
    )(x_bf, h_bf, c, wx, wh, b)


def lstm_cell_ref(x, h, c, w, b):
    """Pure-JAX f32 reference mirroring the PyTorch module."""
    gates = jnp.concatenate([x, h], axis=1) @ w + b
    H = h.shape[1]
    i_t = jax.nn.sigmoid(gates[:, 0 * H:1 * H])
    f_t = jax.nn.sigmoid(gates[:, 1 * H:2 * H])
    o_t = jax.nn.sigmoid(gates[:, 2 * H:3 * H])
    c_hat = jnp.tanh(gates[:, 3 * H:4 * H])
    c_t = f_t * c + i_t * c_hat
    h_t = o_t * jnp.tanh(c_t)
    return h_t, c_t


if __name__ == "__main__":
    B = 8            # batch
    INPUT_SIZE = 128
    HIDDEN = 128     # output_size

    key = jax.random.PRNGKey(0)
    k_x, k_h, k_c, k_w, k_b = jax.random.split(key, 5)

    x_t = jax.random.normal(k_x, (B, INPUT_SIZE), dtype=jnp.float32)
    h_t_1 = jax.random.normal(k_h, (B, HIDDEN), dtype=jnp.float32)
    c_t_1 = jax.random.normal(k_c, (B, HIDDEN), dtype=jnp.float32)

    # nn.Linear(input_size + output_size, output_size * 4) default init:
    # U(-1/sqrt(fan_in), 1/sqrt(fan_in)); weight stored here pre-transposed as
    # (fan_in, 4*hidden) so the kernel does xh @ W.
    fan_in = INPUT_SIZE + HIDDEN
    bound = 1.0 / jnp.sqrt(jnp.float32(fan_in))
    w = jax.random.uniform(k_w, (fan_in, 4 * HIDDEN), jnp.float32, -bound, bound)
    b = jax.random.uniform(k_b, (1, 4 * HIDDEN), jnp.float32, -bound, bound)

    h_t, c_t = lstm_cell(x_t, h_t_1, c_t_1, w, b)
    jax.block_until_ready((h_t, c_t))

    # Reference is full f32; kernel uses bf16 matmul operands + approx
    # reciprocal, so tolerance is loosened (per review) to ~1e-2 level.
    h_ref, c_ref = lstm_cell_ref(x_t, h_t_1, c_t_1, w, b)
    assert jnp.allclose(h_t, h_ref, atol=2e-2, rtol=2e-2), (
        float(jnp.max(jnp.abs(h_t - h_ref))))
    assert jnp.allclose(c_t, c_ref, atol=2e-2, rtol=2e-2), (
        float(jnp.max(jnp.abs(c_t - c_ref))))

    print("KERNEL_OK")
</pallas_src>

<mosaic_0001>
module attributes {stable_mosaic.version = 11 : i64} {
  func.func @lstm_cell_kernel(%arg0: memref<8x128xbf16, #tpu.memory_space<vmem>>, %arg1: memref<8x128xbf16, #tpu.memory_space<vmem>>, %arg2: memref<8x128xf32, #tpu.memory_space<vmem>>, %arg3: memref<128x512xbf16, #tpu.memory_space<vmem>>, %arg4: memref<128x512xbf16, #tpu.memory_space<vmem>>, %arg5: memref<1x512xf32, #tpu.memory_space<vmem>>, %arg6: memref<8x128xf32, #tpu.memory_space<vmem>>, %arg7: memref<8x128xf32, #tpu.memory_space<vmem>>) attributes {dimension_semantics = [], scalar_prefetch = 0 : i64, scratch_operands = 0 : i64, tpu.core_type = #tpu.core_type<tc>} {
    %c0 = arith.constant 0 : index
    %c0_0 = arith.constant 0 : index
    %0 = vector.load %arg0[%c0, %c0_0] : memref<8x128xbf16, #tpu.memory_space<vmem>>, vector<8x128xbf16>
    %c0_1 = arith.constant 0 : index
    %c0_2 = arith.constant 0 : index
    %1 = vector.load %arg3[%c0_1, %c0_2] : memref<128x512xbf16, #tpu.memory_space<vmem>>, vector<128x512xbf16>
    %cst = arith.constant dense<0.000000e+00> : vector<8x512xf32>
    %2 = tpu.matmul %0, %1, %cst {dimension_numbers = #tpu.dot_dimension_numbers<[1], [0], [0], [1], [0, 0, 1, 1], [], []>} : vector<8x128xbf16>, vector<128x512xbf16>, vector<8x512xf32> -> vector<8x512xf32>
    %c0_3 = arith.constant 0 : index
    %c0_4 = arith.constant 0 : index
    %3 = vector.load %arg1[%c0_3, %c0_4] : memref<8x128xbf16, #tpu.memory_space<vmem>>, vector<8x128xbf16>
    %c0_5 = arith.constant 0 : index
    %c0_6 = arith.constant 0 : index
    %4 = vector.load %arg4[%c0_5, %c0_6] : memref<128x512xbf16, #tpu.memory_space<vmem>>, vector<128x512xbf16>
    %cst_7 = arith.constant dense<0.000000e+00> : vector<8x512xf32>
    %5 = tpu.matmul %3, %4, %cst_7 {dimension_numbers = #tpu.dot_dimension_numbers<[1], [0], [0], [1], [0, 0, 1, 1], [], []>} : vector<8x128xbf16>, vector<128x512xbf16>, vector<8x512xf32> -> vector<8x512xf32>
    %6 = arith.addf %2, %5 : vector<8x512xf32>
    %c0_8 = arith.constant 0 : index
    %c0_9 = arith.constant 0 : index
    %7 = vector.load %arg5[%c0_8, %c0_9] : memref<1x512xf32, #tpu.memory_space<vmem>>, vector<1x512xf32>
    %8 = vector.broadcast %7 : vector<1x512xf32> to vector<8x512xf32>
    %9 = arith.addf %6, %8 : vector<8x512xf32>
    %10 = vector.extract_strided_slice %9 {offsets = [0, 0], sizes = [8, 128], strides = [1, 1]} : vector<8x512xf32> to vector<8x128xf32>
    %cst_10 = arith.constant 0.000000e+00 : f32
    %11 = vector.broadcast %cst_10 : f32 to vector<8x128xf32>
    %12 = arith.subf %11, %10 : vector<8x128xf32>
    %13 = math.exp %12 : vector<8x128xf32>
    %cst_11 = arith.constant 1.000000e+00 : f32
    %14 = vector.broadcast %cst_11 : f32 to vector<8x128xf32>
    %15 = arith.addf %14, %13 : vector<8x128xf32>
    %16 = tpu.reciprocal %15 {approx = true} : vector<8x128xf32> -> vector<8x128xf32>
    %17 = vector.extract_strided_slice %9 {offsets = [0, 128], sizes = [8, 128], strides = [1, 1]} : vector<8x512xf32> to vector<8x128xf32>
    %cst_12 = arith.constant 0.000000e+00 : f32
    %18 = vector.broadcast %cst_12 : f32 to vector<8x128xf32>
    %19 = arith.subf %18, %17 : vector<8x128xf32>
    %20 = math.exp %19 : vector<8x128xf32>
    %cst_13 = arith.constant 1.000000e+00 : f32
    %21 = vector.broadcast %cst_13 : f32 to vector<8x128xf32>
    %22 = arith.addf %21, %20 : vector<8x128xf32>
    %23 = tpu.reciprocal %22 {approx = true} : vector<8x128xf32> -> vector<8x128xf32>
    %24 = vector.extract_strided_slice %9 {offsets = [0, 256], sizes = [8, 128], strides = [1, 1]} : vector<8x512xf32> to vector<8x128xf32>
    %cst_14 = arith.constant 0.000000e+00 : f32
    %25 = vector.broadcast %cst_14 : f32 to vector<8x128xf32>
    %26 = arith.subf %25, %24 : vector<8x128xf32>
    %27 = math.exp %26 : vector<8x128xf32>
    %cst_15 = arith.constant 1.000000e+00 : f32
    %28 = vector.broadcast %cst_15 : f32 to vector<8x128xf32>
    %29 = arith.addf %28, %27 : vector<8x128xf32>
    %30 = tpu.reciprocal %29 {approx = true} : vector<8x128xf32> -> vector<8x128xf32>
    %31 = vector.extract_strided_slice %9 {offsets = [0, 384], sizes = [8, 128], strides = [1, 1]} : vector<8x512xf32> to vector<8x128xf32>
    %32 = math.tanh %31 : vector<8x128xf32>
    %c0_16 = arith.constant 0 : index
    %c0_17 = arith.constant 0 : index
    %33 = vector.load %arg2[%c0_16, %c0_17] : memref<8x128xf32, #tpu.memory_space<vmem>>, vector<8x128xf32>
    %34 = arith.mulf %23, %33 : vector<8x128xf32>
    %35 = arith.mulf %16, %32 : vector<8x128xf32>
    %36 = arith.addf %34, %35 : vector<8x128xf32>
    %37 = math.tanh %36 : vector<8x128xf32>
    %38 = arith.mulf %30, %37 : vector<8x128xf32>
    %c0_18 = arith.constant 0 : index
    %c0_19 = arith.constant 0 : index
    %39 = vector.load %arg6[%c0_18, %c0_19] : memref<8x128xf32, #tpu.memory_space<vmem>>, vector<8x128xf32>
    tpu.vector_store %arg6[%c0_18, %c0_19], %38 {strides = array<i32>} : memref<8x128xf32, #tpu.memory_space<vmem>>, vector<8x128xf32>,
    %c0_20 = arith.constant 0 : index
    %c0_21 = arith.constant 0 : index
    %40 = vector.load %arg7[%c0_20, %c0_21] : memref<8x128xf32, #tpu.memory_space<vmem>>, vector<8x128xf32>
    tpu.vector_store %arg7[%c0_20, %c0_21], %36 {strides = array<i32>} : memref<8x128xf32, #tpu.memory_space<vmem>>, vector<8x128xf32>,
    return
  }
}

</mosaic_0001>

<llo_original>
// kernel: tpu_custom_call.1
$region0: #{tpu_custom_call.1}
  #allocation0 [shape = 'u32[]', space=smem, size = 0x4, offset = 0x4, fixed_abs, tag = 'smem constant byte address 0x4 - core index']
  #allocation1 [shape = 'u32[144,128]{1,0:T(1,128)}', space=vmem, size = 0x12000, scoped, tag = 'internal scratch']
  %s0 = inlined_call_operand.hbm [shape: bf16[8,128], index: 0, kind: input, shape index: {}]
  %s1 = inlined_call_operand.hbm [shape: bf16[8,128], index: 1, kind: input, shape index: {}]
  %s2 = inlined_call_operand.hbm [shape: f32[8,128], index: 2, kind: input, shape index: {}]
  %s3 = inlined_call_operand.hbm [shape: bf16[128,512], index: 3, kind: input, shape index: {}]
  %s4 = inlined_call_operand.hbm [shape: bf16[128,512], index: 4, kind: input, shape index: {}]
  %s5 = inlined_call_operand.vmem [shape: f32[1,512], index: 5, kind: input, shape index: {}]
  %s6 = inlined_call_operand.hbm [shape: f32[8,128], index: 6, kind: output, shape index: {0}]
  %s7 = inlined_call_operand.hbm [shape: f32[8,128], index: 7, kind: output, shape index: {1}]
  %8 = xla_tuple %s6, %s7
  %s9 = sld [smem:[#allocation0]]
  $region62: #{tpu_custom_call.1} parent=0
    _
  %s11 = ssub.s32 1, %s9
  %s12 = scalar_select 0, %s11, %s9
  $region1: #{tpu_custom_call.1} parent=0
    #allocation2 [shape = 'u8[2048]{0}', space=vmem, size = 0x800, scoped, tag = 'input window, operand 0, single buffered']
    #allocation3 [shape = 's32[1]{0}', space=sflag, size = 0x4, scoped, tag = 'scoped memory for tpu_custom_call.1']
    #allocation4 [shape = 's32[1]{0}', space=sflag, size = 0x4, scoped, tag = 'scoped memory for tpu_custom_call.1']
    #allocation5 [shape = 'u8[2048]{0}', space=vmem, size = 0x800, scoped, tag = 'input window, operand 1, single buffered']
    #allocation6 [shape = 's32[1]{0}', space=sflag, size = 0x4, scoped, tag = 'scoped memory for tpu_custom_call.1']
    #allocation7 [shape = 'u8[4096]{0}', space=vmem, size = 0x1000, scoped, tag = 'input window, operand 2, single buffered']
    #allocation8 [shape = 'u8[131072]{0}', space=vmem, size = 0x20000, scoped, tag = 'input window, operand 3, single buffered']
    #allocation9 [shape = 's32[1]{0}', space=sflag, size = 0x4, scoped, tag = 'scoped memory for tpu_custom_call.1']
    #allocation10 [shape = 'u8[131072]{0}', space=vmem, size = 0x20000, scoped, tag = 'input window, operand 4, single buffered']
    #allocation11 [shape = 'u8[4096]{0}', space=vmem, size = 0x1000, scoped, tag = 'output window, operand 0, single buffered']
    #allocation12 [shape = 'u8[4096]{0}', space=vmem, size = 0x1000, scoped, tag = 'output window, operand 1, single buffered']
    #allocation13 [shape = 's32[1]{0}', space=sflag, size = 0x4, scoped, tag = 'scoped memory for tpu_custom_call.1']
    %13 = vsyncpa [#allocation3], 0
    %14 = vsyncpa [#allocation6], 0
    %15 = vsyncpa [#allocation9], 0
    %16 = vsyncpa [#allocation4], 0
    %17 = vsyncpa [#allocation13], 0
    // Predicated region
    $region2: #{tpu_custom_call.1} parent=1 // pred_check
      _
    $region3: #{tpu_custom_call.1} parent=1 // pred_check_branch
      %19 = sbr.rel (0) target = $region5
    $region4: #{tpu_custom_call.1} parent=1 // pred_region
      %s21 = ssub.s32 64, 64
      %22 = vsyncadd [#allocation3], %s21
      %s24 = sshll.u32 [#allocation2], 4
      %s25 = int_to_ptr.vmem [resolvable:$true] %s24
      %27 = dma.hbm_to_vmem [thread:$0]  %s0, 64, %s25, [#allocation3]
    $region5: #{tpu_custom_call.1} parent=1 // pred_fallthru
      _
    // Predicated region
    $region6: #{tpu_custom_call.1} parent=1 // pred_check
      _
    $region7: #{tpu_custom_call.1} parent=1 // pred_check_branch
      %29 = sbr.rel (0) target = $region9
    $region8: #{tpu_custom_call.1} parent=1 // pred_region
      %s31 = ssub.s32 64, 64
      %32 = vsyncadd [#allocation6], %s31
      %s34 = sshll.u32 [#allocation5], 4
      %s35 = int_to_ptr.vmem [resolvable:$true] %s34
      %37 = dma.hbm_to_vmem [thread:$0]  %s1, 64, %s35, [#allocation6]
    $region9: #{tpu_custom_call.1} parent=1 // pred_fallthru
      _
    // Predicated region
    $region10: #{tpu_custom_call.1} parent=1 // pred_check
      _
    $region11: #{tpu_custom_call.1} parent=1 // pred_check_branch
      %39 = sbr.rel (0) target = $region13
    $region12: #{tpu_custom_call.1} parent=1 // pred_region
      %s41 = ssub.s32 128, 128
      %42 = vsyncadd [#allocation6], %s41
      %s44 = sshll.u32 [#allocation7], 4
      %s45 = int_to_ptr.vmem [resolvable:$true] %s44
      %47 = dma.hbm_to_vmem [thread:$0]  %s2, 128, %s45, [#allocation6]
    $region13: #{tpu_custom_call.1} parent=1 // pred_fallthru
      _
    // Predicated region
    $region14: #{tpu_custom_call.1} parent=1 // pred_check
      _
    $region15: #{tpu_custom_call.1} parent=1 // pred_check_branch
      %49 = sbr.rel (0) target = $region17
    $region16: #{tpu_custom_call.1} parent=1 // pred_region
      %s51 = ssub.s32 4096, 4096
      %52 = vsyncadd [#allocation9], %s51
      %s53 = sshll.u32 [#allocation8], 4
      %s54 = int_to_ptr.vmem [resolvable:$true] %s53
      %59 = dma.hbm_to_vmem [thread:$0]  %s3, 4096, %s54, [#allocation9], 256, 256, 16
    $region17: #{tpu_custom_call.1} parent=1 // pred_fallthru
      _
    // Predicated region
    $region18: #{tpu_custom_call.1} parent=1 // pred_check
      _
    $region19: #{tpu_custom_call.1} parent=1 // pred_check_branch
      %61 = sbr.rel (0) target = $region21
    $region20: #{tpu_custom_call.1} parent=1 // pred_region
      %s63 = ssub.s32 4096, 4096
      %64 = vsyncadd [#allocation9], %s63
      %s65 = sshll.u32 [#allocation10], 4
      %s66 = int_to_ptr.vmem [resolvable:$true] %s65
      %71 = dma.hbm_to_vmem [thread:$0]  %s4, 4096, %s66, [#allocation9], 256, 256, 16
    $region21: #{tpu_custom_call.1} parent=1 // pred_fallthru
      _
    // Predicated region
    $region22: #{tpu_custom_call.1} parent=1 // pred_check
      _
    $region23: #{tpu_custom_call.1} parent=1 // pred_check_branch
      %73 = sbr.rel (0) target = $region25
    $region24: #{tpu_custom_call.1} parent=1 // pred_region
      _
    $region25: #{tpu_custom_call.1} parent=1 // pred_fallthru
      _
    // Predicated region
    $region26: #{tpu_custom_call.1} parent=1 // pred_check
      _
    $region27: #{tpu_custom_call.1} parent=1 // pred_check_branch
      %75 = sbr.rel (0) target = $region29
    $region28: #{tpu_custom_call.1} parent=1 // pred_region
      %76 = dma.done [#allocation3], 64
    $region29: #{tpu_custom_call.1} parent=1 // pred_fallthru
      _
    // Predicated region
    $region30: #{tpu_custom_call.1} parent=1 // pred_check
      _
    $region31: #{tpu_custom_call.1} parent=1 // pred_check_branch
      %78 = sbr.rel (0) target = $region33
    $region32: #{tpu_custom_call.1} parent=1 // pred_region
      %79 = dma.done [#allocation6], 64
    $region33: #{tpu_custom_call.1} parent=1 // pred_fallthru
      _
    // Predicated region
    $region34: #{tpu_custom_call.1} parent=1 // pred_check
      _
    $region35: #{tpu_custom_call.1} parent=1 // pred_check_branch
      %81 = sbr.rel (0) target = $region37
    $region36: #{tpu_custom_call.1} parent=1 // pred_region
      %82 = dma.done [#allocation6], 128
    $region37: #{tpu_custom_call.1} parent=1 // pred_fallthru
      _
    // Predicated region
    $region38: #{tpu_custom_call.1} parent=1 // pred_check
      _
    $region39: #{tpu_custom_call.1} parent=1 // pred_check_branch
      %84 = sbr.rel (0) target = $region41
    $region40: #{tpu_custom_call.1} parent=1 // pred_region
      %85 = dma.done [#allocation9], 4096
    $region41: #{tpu_custom_call.1} parent=1 // pred_fallthru
      _
    // Predicated region
    $region42: #{tpu_custom_call.1} parent=1 // pred_check
      _
    $region43: #{tpu_custom_call.1} parent=1 // pred_check_branch
      %87 = sbr.rel (0) target = $region45
    $region44: #{tpu_custom_call.1} parent=1 // pred_region
      %88 = dma.done [#allocation9], 4096
    $region45: #{tpu_custom_call.1} parent=1 // pred_fallthru
      _
    %v90 = vld [vmem:[#allocation2] sm:$0xf]
    %v91 = vld [vmem:[#allocation8] sm:$0xff]
    %v92 = vld [vmem:[#allocation8 + $0x8] sm:$0xff]
    %v93 = vld [vmem:[#allocation8 + $0x10] sm:$0xff]
    %v94 = vld [vmem:[#allocation8 + $0x18] sm:$0xff]
    %v95 = vld [vmem:[#allocation8 + $0x20] sm:$0xff]
    %v96 = vld [vmem:[#allocation8 + $0x28] sm:$0xff]
    %v97 = vld [vmem:[#allocation8 + $0x30] sm:$0xff]
    %v98 = vld [vmem:[#allocation8 + $0x38] sm:$0xff]
    %v99 = vld [vmem:[#allocation8 + $0x40] sm:$0xff]
    %v100 = vld [vmem:[#allocation8 + $0x48] sm:$0xff]
    %v101 = vld [vmem:[#allocation8 + $0x50] sm:$0xff]
    %v102 = vld [vmem:[#allocation8 + $0x58] sm:$0xff]
    %v103 = vld [vmem:[#allocation8 + $0x60] sm:$0xff]
    %v104 = vld [vmem:[#allocation8 + $0x68] sm:$0xff]
    %v105 = vld [vmem:[#allocation8 + $0x70] sm:$0xff]
    %v106 = vld [vmem:[#allocation8 + $0x78] sm:$0xff]
    %v107 = vld [vmem:[#allocation8 + $0x80] sm:$0xff]
    %v108 = vld [vmem:[#allocation8 + $0x88] sm:$0xff]
    %v109 = vld [vmem:[#allocation8 + $0x90] sm:$0xff]
    %v110 = vld [vmem:[#allocation8 + $0x98] sm:$0xff]
    %v111 = vld [vmem:[#allocation8 + $0xa0] sm:$0xff]
    %v112 = vld [vmem:[#allocation8 + $0xa8] sm:$0xff]
    %v113 = vld [vmem:[#allocation8 + $0xb0] sm:$0xff]
    %v114 = vld [vmem:[#allocation8 + $0xb8] sm:$0xff]
    %v115 = vld [vmem:[#allocation8 + $0xc0] sm:$0xff]
    %v116 = vld [vmem:[#allocation8 + $0xc8] sm:$0xff]
    %v117 = vld [vmem:[#allocation8 + $0xd0] sm:$0xff]
    %v118 = vld [vmem:[#allocation8 + $0xd8] sm:$0xff]
    %v119 = vld [vmem:[#allocation8 + $0xe0] sm:$0xff]
    %v120 = vld [vmem:[#allocation8 + $0xe8] sm:$0xff]
    %v121 = vld [vmem:[#allocation8 + $0xf0] sm:$0xff]
    %v122 = vld [vmem:[#allocation8 + $0xf8] sm:$0xff]
    %v123 = vld [vmem:[#allocation5] sm:$0xf]
    %v124 = vld [vmem:[#allocation10] sm:$0xff]
    %v125 = vld [vmem:[#allocation10 + $0x8] sm:$0xff]
    %v126 = vld [vmem:[#allocation10 + $0x10] sm:$0xff]
    %v127 = vld [vmem:[#allocation10 + $0x18] sm:$0xff]
    %v128 = vld [vmem:[#allocation10 + $0x20] sm:$0xff]
    %v129 = vld [vmem:[#allocation10 + $0x28] sm:$0xff]
    %v130 = vld [vmem:[#allocation10 + $0x30] sm:$0xff]
    %v131 = vld [vmem:[#allocation10 + $0x38] sm:$0xff]
    %v132 = vld [vmem:[#allocation10 + $0x40] sm:$0xff]
    %v133 = vld [vmem:[#allocation10 + $0x48] sm:$0xff]
    %v134 = vld [vmem:[#allocation10 + $0x50] sm:$0xff]
    %v135 = vld [vmem:[#allocation10 + $0x58] sm:$0xff]
    %v136 = vld [vmem:[#allocation10 + $0x60] sm:$0xff]
    %v137 = vld [vmem:[#allocation10 + $0x68] sm:$0xff]
    %v138 = vld [vmem:[#allocation10 + $0x70] sm:$0xff]
    %v139 = vld [vmem:[#allocation10 + $0x78] sm:$0xff]
    %v140 = vld [vmem:[#allocation10 + $0x80] sm:$0xff]
    %v141 = vld [vmem:[#allocation10 + $0x88] sm:$0xff]
    %v142 = vld [vmem:[#allocation10 + $0x90] sm:$0xff]
    %v143 = vld [vmem:[#allocation10 + $0x98] sm:$0xff]
    %v144 = vld [vmem:[#allocation10 + $0xa0] sm:$0xff]
    %v145 = vld [vmem:[#allocation10 + $0xa8] sm:$0xff]
    %v146 = vld [vmem:[#allocation10 + $0xb0] sm:$0xff]
    %v147 = vld [vmem:[#allocation10 + $0xb8] sm:$0xff]
    %v148 = vld [vmem:[#allocation10 + $0xc0] sm:$0xff]
    %v149 = vld [vmem:[#allocation10 + $0xc8] sm:$0xff]
    %v150 = vld [vmem:[#allocation10 + $0xd0] sm:$0xff]
    %v151 = vld [vmem:[#allocation10 + $0xd8] sm:$0xff]
    %v152 = vld [vmem:[#allocation10 + $0xe0] sm:$0xff]
    %v153 = vld [vmem:[#allocation10 + $0xe8] sm:$0xff]
    %v154 = vld [vmem:[#allocation10 + $0xf0] sm:$0xff]
    %v155 = vld [vmem:[#allocation10 + $0xf8] sm:$0xff]
    %v188 = vunpack.c.l.b16 %v124
    %v189 = vunpack.c.h.b16 %v124
    %v190 = vunpack.c.l.b16 %v125
    %v191 = vunpack.c.h.b16 %v125
    %v192 = vunpack.c.l.b16 %v126
    %v193 = vunpack.c.h.b16 %v126
    %v194 = vunpack.c.l.b16 %v127
    %v195 = vunpack.c.h.b16 %v127
    %v196 = vunpack.c.l.b16 %v128
    %v197 = vunpack.c.h.b16 %v128
    %v198 = vunpack.c.l.b16 %v129
    %v199 = vunpack.c.h.b16 %v129
    %v200 = vunpack.c.l.b16 %v130
    %v201 = vunpack.c.h.b16 %v130
    %v202 = vunpack.c.l.b16 %v131
    %v203 = vunpack.c.h.b16 %v131
    %v204 = vunpack.c.l.b16 %v132
    %v205 = vunpack.c.h.b16 %v132
    %v206 = vunpack.c.l.b16 %v133
    %v207 = vunpack.c.h.b16 %v133
    %v208 = vunpack.c.l.b16 %v134
    %v209 = vunpack.c.h.b16 %v134
    %v210 = vunpack.c.l.b16 %v135
    %v211 = vunpack.c.h.b16 %v135
    %v212 = vunpack.c.l.b16 %v136
    %v213 = vunpack.c.h.b16 %v136
    %v214 = vunpack.c.l.b16 %v137
    %v215 = vunpack.c.h.b16 %v137
    %v216 = vunpack.c.l.b16 %v138
    %v217 = vunpack.c.h.b16 %v138
    %v218 = vunpack.c.l.b16 %v139
    %v219 = vunpack.c.h.b16 %v139
    %v220 = vunpack.c.l.b16 %v140
    %v221 = vunpack.c.h.b16 %v140
    %v222 = vunpack.c.l.b16 %v141
    %v223 = vunpack.c.h.b16 %v141
    %v224 = vunpack.c.l.b16 %v142
    %v225 = vunpack.c.h.b16 %v142
    %v226 = vunpack.c.l.b16 %v143
    %v227 = vunpack.c.h.b16 %v143
    %v228 = vunpack.c.l.b16 %v144
    %v229 = vunpack.c.h.b16 %v144
    %v230 = vunpack.c.l.b16 %v145
    %v231 = vunpack.c.h.b16 %v145
    %v232 = vunpack.c.l.b16 %v146
    %v233 = vunpack.c.h.b16 %v146
    %v234 = vunpack.c.l.b16 %v147
    %v235 = vunpack.c.h.b16 %v147
    %v236 = vunpack.c.l.b16 %v148
    %v237 = vunpack.c.h.b16 %v148
    %v238 = vunpack.c.l.b16 %v149
    %v239 = vunpack.c.h.b16 %v149
    %v240 = vunpack.c.l.b16 %v150
    %v241 = vunpack.c.h.b16 %v150
    %v242 = vunpack.c.l.b16 %v151
    %v243 = vunpack.c.h.b16 %v151
    %v244 = vunpack.c.l.b16 %v152
    %v245 = vunpack.c.h.b16 %v152
    %v246 = vunpack.c.l.b16 %v153
    %v247 = vunpack.c.h.b16 %v153
    %v248 = vunpack.c.l.b16 %v154
    %v249 = vunpack.c.h.b16 %v154
    %v250 = vunpack.c.l.b16 %v155
    %v251 = vunpack.c.h.b16 %v155
    %v252 = vpack.c.b16 %v192, %v188
    %v253 = vpack.c.b16 %v193, %v189
    %v254 = vpack.c.b16 %v194, %v190
    %v255 = vpack.c.b16 %v195, %v191
    %v256 = vpack.c.b16 %v200, %v196
    %v257 = vpack.c.b16 %v201, %v197
    %v258 = vpack.c.b16 %v202, %v198
    %v259 = vpack.c.b16 %v203, %v199
    %v260 = vpack.c.b16 %v208, %v204
    %v261 = vpack.c.b16 %v209, %v205
    %v262 = vpack.c.b16 %v210, %v206
    %v263 = vpack.c.b16 %v211, %v207
    %v264 = vpack.c.b16 %v216, %v212
    %v265 = vpack.c.b16 %v217, %v213
    %v266 = vpack.c.b16 %v218, %v214
    %v267 = vpack.c.b16 %v219, %v215
    %v268 = vpack.c.b16 %v224, %v220
    %v269 = vpack.c.b16 %v225, %v221
    %v270 = vpack.c.b16 %v226, %v222
    %v271 = vpack.c.b16 %v227, %v223
    %v272 = vpack.c.b16 %v232, %v228
    %v273 = vpack.c.b16 %v233, %v229
    %v274 = vpack.c.b16 %v234, %v230
    %v275 = vpack.c.b16 %v235, %v231
    %v276 = vpack.c.b16 %v240, %v236
    %v277 = vpack.c.b16 %v241, %v237
    %v278 = vpack.c.b16 %v242, %v238
    %v279 = vpack.c.b16 %v243, %v239
    %v280 = vpack.c.b16 %v248, %v244
    %v281 = vpack.c.b16 %v249, %v245
    %v282 = vpack.c.b16 %v250, %v246
    %v283 = vpack.c.b16 %v251, %v247
    %316 = vmatprep.subr.bf16.mxu0 %v281
    %317 = vmatpush1.bf16.msra.mxu0 %v280
    %318 = vmatprep.subr.bf16.mxu0 %v277
    %319 = vmatpush1.bf16.msra.mxu0 %v276
    %320 = vmatprep.subr.bf16.mxu0 %v273
    %321 = vmatpush1.bf16.msra.mxu0 %v272
    %322 = vmatprep.subr.bf16.mxu0 %v269
    %323 = vmatpush1.bf16.msra.mxu0 %v268
    %324 = vmatprep.subr.bf16.mxu0 %v265
    %325 = vmatpush1.bf16.msra.mxu0 %v264
    %326 = vmatprep.subr.bf16.mxu0 %v261
    %327 = vmatpush1.bf16.msra.mxu0 %v260
    %328 = vmatprep.subr.bf16.mxu0 %v257
    %329 = vmatpush1.bf16.msra.mxu0 %v256
    %330 = vmatprep.subr.bf16.mxu0 %v253
    %331 = vmatpush1.bf16.msra.mxu0 %v252
    %332 = vmatprep.subr.bf16.mxu0 0
    %333 = vmatpush2.bf16.msra.mxu0 0
    %334 = vmatprep.subr.bf16.mxu0 0
    %335 = vmatpush2.bf16.msra.mxu0 0
    %336 = vmatprep.subr.bf16.mxu0 0
    %337 = vmatpush2.bf16.msra.mxu0 0
    %338 = vmatprep.subr.bf16.mxu0 0
    %339 = vmatpush2.bf16.msra.mxu0 0
    %340 = vmatprep.subr.bf16.mxu0 0
    %341 = vmatpush2.bf16.msra.mxu0 0
    %342 = vmatprep.subr.bf16.mxu0 0
    %343 = vmatpush2.bf16.msra.mxu0 0
    %344 = vmatprep.subr.bf16.mxu0 0
    %345 = vmatpush2.bf16.msra.mxu0 0
    %346 = vmatprep.subr.bf16.mxu0 0
    %347 = vmatpush2.bf16.msra.mxu0 0
    %348 = vmatprep.mubr.bf16.mxu0 0
    %349 = vmatmul.mubr.bf16.gmra.mxu0 %v123
    %v350 = vpop.f32.mrf.mxu0
    %v351 = vadd.f32 0.0, %v350
    %v352 = vpop.f32.mrf.mxu0
    %v353 = vadd.f32 0.0, %v352
    %v354 = vpop.f32.mrf.mxu0
    %v355 = vpop.f32.mrf.mxu0
    %356 = vdwg.mxu0
    %357 = vmatprep.subr.bf16.mxu0 %v283
    %358 = vmatpush1.bf16.msra.mxu0 %v282
    %359 = vmatprep.subr.bf16.mxu0 %v279
    %360 = vmatpush1.bf16.msra.mxu0 %v278
    %361 = vmatprep.subr.bf16.mxu0 %v275
    %362 = vmatpush1.bf16.msra.mxu0 %v274
    %363 = vmatprep.subr.bf16.mxu0 %v271
    %364 = vmatpush1.bf16.msra.mxu0 %v270
    %365 = vmatprep.subr.bf16.mxu0 %v267
    %366 = vmatpush1.bf16.msra.mxu0 %v266
    %367 = vmatprep.subr.bf16.mxu0 %v263
    %368 = vmatpush1.bf16.msra.mxu0 %v262
    %369 = vmatprep.subr.bf16.mxu0 %v259
    %370 = vmatpush1.bf16.msra.mxu0 %v258
    %371 = vmatprep.subr.bf16.mxu0 %v255
    %372 = vmatpush1.bf16.msra.mxu0 %v254
    %373 = vmatprep.subr.bf16.mxu0 0
    %374 = vmatpush2.bf16.msra.mxu0 0
    %375 = vmatprep.subr.bf16.mxu0 0
    %376 = vmatpush2.bf16.msra.mxu0 0
    %377 = vmatprep.subr.bf16.mxu0 0
    %378 = vmatpush2.bf16.msra.mxu0 0
    %379 = vmatprep.subr.bf16.mxu0 0
    %380 = vmatpush2.bf16.msra.mxu0 0
    %381 = vmatprep.subr.bf16.mxu0 0
    %382 = vmatpush2.bf16.msra.mxu0 0
    %383 = vmatprep.subr.bf16.mxu0 0
    %384 = vmatpush2.bf16.msra.mxu0 0
    %385 = vmatprep.subr.bf16.mxu0 0
    %386 = vmatpush2.bf16.msra.mxu0 0
    %387 = vmatprep.subr.bf16.mxu0 0
    %388 = vmatpush2.bf16.msra.mxu0 0
    %389 = vmatprep.mubr.bf16.mxu0 0
    %390 = vmatmul.mubr.bf16.gmra.mxu0 %v123
    %v391 = vpop.f32.mrf.mxu0
    %v392 = vadd.f32 0.0, %v391
    %v393 = vpop.f32.mrf.mxu0
    %v394 = vadd.f32 0.0, %v393
    %v395 = vpop.f32.mrf.mxu0
    %v396 = vpop.f32.mrf.mxu0
    %397 = vdwg.mxu0
    %v430 = vunpack.c.l.b16 %v91
    %v431 = vunpack.c.h.b16 %v91
    %v432 = vunpack.c.l.b16 %v92
    %v433 = vunpack.c.h.b16 %v92
    %v434 = vunpack.c.l.b16 %v93
    %v435 = vunpack.c.h.b16 %v93
    %v436 = vunpack.c.l.b16 %v94
    %v437 = vunpack.c.h.b16 %v94
    %v438 = vunpack.c.l.b16 %v95
    %v439 = vunpack.c.h.b16 %v95
    %v440 = vunpack.c.l.b16 %v96
    %v441 = vunpack.c.h.b16 %v96
    %v442 = vunpack.c.l.b16 %v97
    %v443 = vunpack.c.h.b16 %v97
    %v444 = vunpack.c.l.b16 %v98
    %v445 = vunpack.c.h.b16 %v98
    %v446 = vunpack.c.l.b16 %v99
    %v447 = vunpack.c.h.b16 %v99
    %v448 = vunpack.c.l.b16 %v100
    %v449 = vunpack.c.h.b16 %v100
    %v450 = vunpack.c.l.b16 %v101
    %v451 = vunpack.c.h.b16 %v101
    %v452 = vunpack.c.l.b16 %v102
    %v453 = vunpack.c.h.b16 %v102
    %v454 = vunpack.c.l.b16 %v103
    %v455 = vunpack.c.h.b16 %v103
    %v456 = vunpack.c.l.b16 %v104
    %v457 = vunpack.c.h.b16 %v104
    %v458 = vunpack.c.l.b16 %v105
    %v459 = vunpack.c.h.b16 %v105
    %v460 = vunpack.c.l.b16 %v106
    %v461 = vunpack.c.h.b16 %v106
    %v462 = vunpack.c.l.b16 %v107
    %v463 = vunpack.c.h.b16 %v107
    %v464 = vunpack.c.l.b16 %v108
    %v465 = vunpack.c.h.b16 %v108
    %v466 = vunpack.c.l.b16 %v109
    %v467 = vunpack.c.h.b16 %v109
    %v468 = vunpack.c.l.b16 %v110
    %v469 = vunpack.c.h.b16 %v110
    %v470 = vunpack.c.l.b16 %v111
    %v471 = vunpack.c.h.b16 %v111
    %v472 = vunpack.c.l.b16 %v112
    %v473 = vunpack.c.h.b16 %v112
    %v474 = vunpack.c.l.b16 %v113
    %v475 = vunpack.c.h.b16 %v113
    %v476 = vunpack.c.l.b16 %v114
    %v477 = vunpack.c.h.b16 %v114
    %v478 = vunpack.c.l.b16 %v115
    %v479 = vunpack.c.h.b16 %v115
    %v480 = vunpack.c.l.b16 %v116
    %v481 = vunpack.c.h.b16 %v116
    %v482 = vunpack.c.l.b16 %v117
    %v483 = vunpack.c.h.b16 %v117
    %v484 = vunpack.c.l.b16 %v118
    %v485 = vunpack.c.h.b16 %v118
    %v486 = vunpack.c.l.b16 %v119
    %v487 = vunpack.c.h.b16 %v119
    %v488 = vunpack.c.l.b16 %v120
    %v489 = vunpack.c.h.b16 %v120
    %v490 = vunpack.c.l.b16 %v121
    %v491 = vunpack.c.h.b16 %v121
    %v492 = vunpack.c.l.b16 %v122
    %v493 = vunpack.c.h.b16 %v122
    %v494 = vpack.c.b16 %v434, %v430
    %v495 = vpack.c.b16 %v435, %v431
    %v496 = vpack.c.b16 %v436, %v432
    %v497 = vpack.c.b16 %v437, %v433
    %v498 = vpack.c.b16 %v442, %v438
    %v499 = vpack.c.b16 %v443, %v439
    %v500 = vpack.c.b16 %v444, %v440
    %v501 = vpack.c.b16 %v445, %v441
    %v502 = vpack.c.b16 %v450, %v446
    %v503 = vpack.c.b16 %v451, %v447
    %v504 = vpack.c.b16 %v452, %v448
    %v505 = vpack.c.b16 %v453, %v449
    %v506 = vpack.c.b16 %v458, %v454
    %v507 = vpack.c.b16 %v459, %v455
    %v508 = vpack.c.b16 %v460, %v456
    %v509 = vpack.c.b16 %v461, %v457
    %v510 = vpack.c.b16 %v466, %v462
    %v511 = vpack.c.b16 %v467, %v463
    %v512 = vpack.c.b16 %v468, %v464
    %v513 = vpack.c.b16 %v469, %v465
    %v514 = vpack.c.b16 %v474, %v470
    %v515 = vpack.c.b16 %v475, %v471
    %v516 = vpack.c.b16 %v476, %v472
    %v517 = vpack.c.b16 %v477, %v473
    %v518 = vpack.c.b16 %v482, %v478
    %v519 = vpack.c.b16 %v483, %v479
    %v520 = vpack.c.b16 %v484, %v480
    %v521 = vpack.c.b16 %v485, %v481
    %v522 = vpack.c.b16 %v490, %v486
    %v523 = vpack.c.b16 %v491, %v487
    %v524 = vpack.c.b16 %v492, %v488
    %v525 = vpack.c.b16 %v493, %v489
    %558 = vmatprep.subr.bf16.mxu0 %v523
    %559 = vmatpush1.bf16.msra.mxu0 %v522
    %560 = vmatprep.subr.bf16.mxu0 %v519
    %561 = vmatpush1.bf16.msra.mxu0 %v518
    %562 = vmatprep.subr.bf16.mxu0 %v515
    %563 = vmatpush1.bf16.msra.mxu0 %v514
    %564 = vmatprep.subr.bf16.mxu0 %v511
    %565 = vmatpush1.bf16.msra.mxu0 %v510
    %566 = vmatprep.subr.bf16.mxu0 %v507
    %567 = vmatpush1.bf16.msra.mxu0 %v506
    %568 = vmatprep.subr.bf16.mxu0 %v503
    %569 = vmatpush1.bf16.msra.mxu0 %v502
    %570 = vmatprep.subr.bf16.mxu0 %v499
    %571 = vmatpush1.bf16.msra.mxu0 %v498
    %572 = vmatprep.subr.bf16.mxu0 %v495
    %573 = vmatpush1.bf16.msra.mxu0 %v494
    %574 = vmatprep.subr.bf16.mxu0 0
    %575 = vmatpush2.bf16.msra.mxu0 0
    %576 = vmatprep.subr.bf16.mxu0 0
    %577 = vmatpush2.bf16.msra.mxu0 0
    %578 = vmatprep.subr.bf16.mxu0 0
    %579 = vmatpush2.bf16.msra.mxu0 0
    %580 = vmatprep.subr.bf16.mxu0 0
    %581 = vmatpush2.bf16.msra.mxu0 0
    %582 = vmatprep.subr.bf16.mxu0 0
    %583 = vmatpush2.bf16.msra.mxu0 0
    %584 = vmatprep.subr.bf16.mxu0 0
    %585 = vmatpush2.bf16.msra.mxu0 0
    %586 = vmatprep.subr.bf16.mxu0 0
    %587 = vmatpush2.bf16.msra.mxu0 0
    %588 = vmatprep.subr.bf16.mxu0 0
    %589 = vmatpush2.bf16.msra.mxu0 0
    %590 = vmatprep.mubr.bf16.mxu0 0
    %591 = vmatmul.mubr.bf16.gmra.mxu0 %v90
    %v592 = vpop.f32.mrf.mxu0
    %v593 = vadd.f32 %v351, %v592
    %v594 = vpop.f32.mrf.mxu0
    %v595 = vadd.f32 %v353, %v594
    %v596 = vpop.f32.mrf.mxu0
    %v597 = vpop.f32.mrf.mxu0
    %598 = vdwg.mxu0
    %599 = vmatprep.subr.bf16.mxu0 %v525
    %600 = vmatpush1.bf16.msra.mxu0 %v524
    %601 = vmatprep.subr.bf16.mxu0 %v521
    %602 = vmatpush1.bf16.msra.mxu0 %v520
    %603 = vmatprep.subr.bf16.mxu0 %v517
    %604 = vmatpush1.bf16.msra.mxu0 %v516
    %605 = vmatprep.subr.bf16.mxu0 %v513
    %606 = vmatpush1.bf16.msra.mxu0 %v512
    %607 = vmatprep.subr.bf16.mxu0 %v509
    %608 = vmatpush1.bf16.msra.mxu0 %v508
    %609 = vmatprep.subr.bf16.mxu0 %v505
    %610 = vmatpush1.bf16.msra.mxu0 %v504
    %611 = vmatprep.subr.bf16.mxu0 %v501
    %612 = vmatpush1.bf16.msra.mxu0 %v500
    %613 = vmatprep.subr.bf16.mxu0 %v497
    %614 = vmatpush1.bf16.msra.mxu0 %v496
    %615 = vmatprep.subr.bf16.mxu0 0
    %616 = vmatpush2.bf16.msra.mxu0 0
    %617 = vmatprep.subr.bf16.mxu0 0
    %618 = vmatpush2.bf16.msra.mxu0 0
    %619 = vmatprep.subr.bf16.mxu0 0
    %620 = vmatpush2.bf16.msra.mxu0 0
    %621 = vmatprep.subr.bf16.mxu0 0
    %622 = vmatpush2.bf16.msra.mxu0 0
    %623 = vmatprep.subr.bf16.mxu0 0
    %624 = vmatpush2.bf16.msra.mxu0 0
    %625 = vmatprep.subr.bf16.mxu0 0
    %626 = vmatpush2.bf16.msra.mxu0 0
    %627 = vmatprep.subr.bf16.mxu0 0
    %628 = vmatpush2.bf16.msra.mxu0 0
    %629 = vmatprep.subr.bf16.mxu0 0
    %630 = vmatpush2.bf16.msra.mxu0 0
    %631 = vmatprep.mubr.bf16.mxu0 0
    %632 = vmatmul.mubr.bf16.gmra.mxu0 %v90
    %v633 = vpop.f32.mrf.mxu0
    %v634 = vadd.f32 %v392, %v633
    %v635 = vpop.f32.mrf.mxu0
    %v636 = vadd.f32 %v394, %v635
    %v637 = vpop.f32.mrf.mxu0
    %v638 = vpop.f32.mrf.mxu0
    %639 = vdwg.mxu0
    %v640 = vld [vmem:[%s5] sm:$0xf]
    %v642 = vlaneseq
    %v643 = vshrl.u32 %v642, 7
    %v644 = vsub.s32 0, %v643
    %v645 = vrot.slane %v640, %v644
    %v646 = vlaneseq
    %v647 = vshrl.u32 %v646, 7
    %v648 = vsub.s32 1, %v647
    %v649 = vrot.slane %v640, %v648
    %v650 = vlaneseq
    %v651 = vshrl.u32 %v650, 7
    %v652 = vsub.s32 2, %v651
    %v653 = vrot.slane %v640, %v652
    %v654 = vlaneseq
    %v655 = vshrl.u32 %v654, 7
    %v656 = vsub.s32 3, %v655
    %v657 = vrot.slane %v640, %v656
    %v662 = vadd.f32 %v593, %v645
    %v663 = vadd.f32 %v595, %v649
    %v664 = vadd.f32 %v634, %v653
    %v665 = vadd.f32 %v636, %v657
    %v666 = vsub.f32 0.0, %v662
    %v667 = vmul.f32 %v666, 1.442695
    %v668 = vpow.pop %v667
    %v669 = vadd.f32 %v668, 1.0
    %v670 = vrcp.pop %v669
    %v671 = vsub.f32 0.0, %v663
    %v672 = vmul.f32 %v671, 1.442695
    %v673 = vpow.pop %v672
    %v674 = vadd.f32 %v673, 1.0
    %v675 = vrcp.pop %v674
    %v676 = vsub.f32 0.0, %v664
    %v677 = vmul.f32 %v676, 1.442695
    %v678 = vpow.pop %v677
    %v679 = vadd.f32 %v678, 1.0
    %v680 = vrcp.pop %v679
    %v681 = vtanh.pop %v665
    %v682 = vld [vmem:[#allocation7] sm:$0xff]
    %v683 = vmul.f32 %v675, %v682
    %v684 = vmul.f32 %v670, %v681
    %v685 = vadd.f32 %v683, %v684
    %v686 = vtanh.pop %v685
    %v687 = vmul.f32 %v680, %v686
    %688 = vst [vmem:[#allocation11] sm:$0xff] %v687
    %689 = vst [vmem:[#allocation12] sm:$0xff] %v685
    // Predicated region
    $region46: #{tpu_custom_call.1} parent=1 // pred_check
      _
    $region47: #{tpu_custom_call.1} parent=1 // pred_check_branch
      %691 = sbr.rel (0) target = $region49
    $region48: #{tpu_custom_call.1} parent=1 // pred_region
      %s693 = ssub.s32 128, 128
      %694 = vsyncadd [#allocation4], %s693
      %s696 = sshll.u32 [#allocation11], 4
      %s697 = int_to_ptr.vmem [resolvable:$true] %s696
      %699 = dma.vmem_to_hbm [thread:$0]  %s697, 128, %s6, [#allocation4]
    $region49: #{tpu_custom_call.1} parent=1 // pred_fallthru
      _
    // Predicated region
    $region50: #{tpu_custom_call.1} parent=1 // pred_check
      _
    $region51: #{tpu_custom_call.1} parent=1 // pred_check_branch
      %701 = sbr.rel (0) target = $region53
    $region52: #{tpu_custom_call.1} parent=1 // pred_region
      %s703 = ssub.s32 128, 128
      %704 = vsyncadd [#allocation13], %s703
      %s706 = sshll.u32 [#allocation12], 4
      %s707 = int_to_ptr.vmem [resolvable:$true] %s706
      %709 = dma.vmem_to_hbm [thread:$0]  %s707, 128, %s7, [#allocation13]
    $region53: #{tpu_custom_call.1} parent=1 // pred_fallthru
      _
    // Predicated region
    $region54: #{tpu_custom_call.1} parent=1 // pred_check
      _
    $region55: #{tpu_custom_call.1} parent=1 // pred_check_branch
      %711 = sbr.rel (0) target = $region57
    $region56: #{tpu_custom_call.1} parent=1 // pred_region
      %712 = dma.done [#allocation4], 128
    $region57: #{tpu_custom_call.1} parent=1 // pred_fallthru
      _
    // Predicated region
    $region58: #{tpu_custom_call.1} parent=1 // pred_check
      _
    $region59: #{tpu_custom_call.1} parent=1 // pred_check_branch
      %714 = sbr.rel (0) target = $region61
    $region60: #{tpu_custom_call.1} parent=1 // pred_region
      %715 = dma.done [#allocation13], 128
    $region61: #{tpu_custom_call.1} parent=1 // pred_fallthru
      _
    %716 = vsyncpa [#allocation3], 1
    %717 = vsyncpa [#allocation6], 1
    %718 = vsyncpa [#allocation9], 1
    %719 = vsyncpa [#allocation4], 1
    %720 = vsyncpa [#allocation13], 1

</llo_original>
